<compile_context>
chip_gen: v7x
topology: tpu7x:2x2x1
jax: 0.10.0
libtpu: 0.0.40
codegen_flags: <defaults>
</compile_context>

<pallas_src>
import jax
import jax.numpy as jnp
from jax.experimental import pallas as pl
from jax.experimental.pallas import tpu as pltpu

DEFAULT_POLYDEGREE = 3
MAX_APPROP = 5.0            # module hyper-parameter (max_approp)
INPUT_SIZE = 2              # module default
HIDDEN_SIZE = 10            # module default
POLY_OUT = (DEFAULT_POLYDEGREE + 1) * (DEFAULT_POLYDEGREE + 2) // 2  # = 10 (include_bias=True)

_LANES = 128


def _neural_approp_kernel(yt_ref, rt_ref, w1_ref, b1_ref, w2_ref, b2_ref, out_ref):
    """One (tile_rows, 128) lane-dense tile of the NeuralAppropRule forward pass."""
    x0 = yt_ref[...]                       # (tr, 128)   x0 = yt
    x1 = x0 * rt_ref[...]                  # (tr, 128)   x1 = yt * rt

    # Degree-3 polynomial features in PolyFeatures order:
    #   [1, x0, x1, x0^2, x0*x1, x1^2, x0^3, x0^2*x1, x0*x1^2, x1^3]
    # Shared subexpressions reused explicitly (don't rely on CSE).
    x00 = x0 * x0
    x01 = x0 * x1
    x11 = x1 * x1
    feats = (x0, x1, x00, x01, x11,
             x00 * x0, x00 * x1, x11 * x0, x11 * x1)   # features 1..9 (feature 0 == 1)

    n_feat = w1_ref.shape[0]               # 10
    n_hidden = w1_ref.shape[1]             # 10

    # logits = b2 + sum_j w2[j] * relu(b1[j] + sum_i w1[i, j] * feat_i)
    logits = b2_ref[0]                     # scalar; broadcasts on first accumulation
    for j in range(n_hidden):
        # Fold the constant bias feature (feat_0 == 1) into the scalar start value.
        h = b1_ref[j] + w1_ref[0, j]       # scalar (SMEM reads)
        for i in range(1, n_feat):
            h = h + w1_ref[i, j] * feats[i - 1]   # scalar-weight FMA on full vregs
        h = jnp.maximum(h, 0.0)            # ReLU
        logits = logits + w2_ref[j] * h

    # max_approp * sigmoid(logits):  exp -> EUP, approx reciprocal -> EUP (VALU stays free).
    out_ref[...] = MAX_APPROP * pl.reciprocal(1.0 + jnp.exp(-logits), approx=True)


def neural_approp_rule(yt, rt, w1, b1, w2, b2, *, tile_rows=512):
    """yt, rt: (N,).  w1: (P, H), b1: (H,), w2: (H, 1), b2: (1,).  Returns (N, 1) f32."""
    N = yt.shape[0]
    P, H = w1.shape
    assert P == POLY_OUT, "w1 must have POLY_OUT input features for degree-3 PolyFeatures"
    assert tile_rows % 8 == 0

    # Lane-dense layout: element n lives at (n // 128, n % 128); zero-pad the tail.
    rows = -(-N // _LANES)
    if rows <= tile_rows:
        tr = max(8, ((rows + 7) // 8) * 8)     # single tile, sublane-aligned
        rows_pad = tr
    else:
        tr = tile_rows
        rows_pad = -(-rows // tr) * tr
    n_pad = rows_pad * _LANES - N

    yt2 = jnp.pad(yt.astype(jnp.float32), (0, n_pad)).reshape(rows_pad, _LANES)
    rt2 = jnp.pad(rt.astype(jnp.float32), (0, n_pad)).reshape(rows_pad, _LANES)

    # Tiny weights -> SMEM (resident across all grid steps, read as scalars in the kernel).
    w1f = w1.astype(jnp.float32)               # (P, H)
    b1f = b1.reshape(H).astype(jnp.float32)    # (H,)
    w2f = w2.reshape(H).astype(jnp.float32)    # (H,)
    b2f = b2.reshape(1).astype(jnp.float32)    # (1,)

    data_spec = pl.BlockSpec((tr, _LANES), lambda i: (i, 0))
    smem_spec = pl.BlockSpec(memory_space=pltpu.MemorySpace.SMEM)

    out = pl.pallas_call(
        _neural_approp_kernel,
        grid=(rows_pad // tr,),
        in_specs=[data_spec, data_spec, smem_spec, smem_spec, smem_spec, smem_spec],
        out_specs=data_spec,
        out_shape=jax.ShapeDtypeStruct((rows_pad, _LANES), jnp.float32),
        compiler_params=pltpu.CompilerParams(
            dimension_semantics=("parallel",)),
    )(yt2, rt2, w1f, b1f, w2f, b2f)

    return out.reshape(-1)[:N].reshape(N, 1)


def _reference(yt, rt, w1, b1, w2, b2):
    """Pure-JAX reference mirroring the PyTorch forward."""
    x0 = yt.astype(jnp.float32)
    x1 = x0 * rt.astype(jnp.float32)
    XP = jnp.stack(
        [jnp.ones_like(x0), x0, x1,
         x0 * x0, x0 * x1, x1 * x1,
         x0 ** 3, x0 * x0 * x1, x0 * x1 * x1, x1 ** 3],
        axis=1,
    )
    h = jnp.maximum(XP @ w1 + b1, 0.0)
    return MAX_APPROP * jax.nn.sigmoid(h @ w2 + b2)


if __name__ == "__main__":
    key = jax.random.PRNGKey(0)
    k_yt, k_rt, k_w1, k_b1, k_w2, k_b2 = jax.random.split(key, 6)

    P, H = POLY_OUT, HIDDEN_SIZE

    # Deterministic synthetic parameters (nn.Linear-style uniform fan-in init).
    bound1 = 1.0 / (P ** 0.5)
    w1 = jax.random.uniform(k_w1, (P, H), minval=-bound1, maxval=bound1, dtype=jnp.float32)
    b1 = jax.random.uniform(k_b1, (H,), minval=-bound1, maxval=bound1, dtype=jnp.float32)
    bound2 = 1.0 / (H ** 0.5)
    w2 = jax.random.uniform(k_w2, (H, 1), minval=-bound2, maxval=bound2, dtype=jnp.float32)
    b2 = jax.random.uniform(k_b2, (1,), minval=-bound2, maxval=bound2, dtype=jnp.float32)

    # Tolerance accounts for the approx EUP reciprocal in the in-kernel sigmoid (output <= 5.0).
    TOL = 2e-2

    # Case 1: small N, not a multiple of 128 (exercises the zero-padded tail).
    N1 = 300
    yt1 = jax.random.normal(k_yt, (N1,), dtype=jnp.float32)
    rt1 = jax.random.uniform(k_rt, (N1,), minval=0.5, maxval=1.5, dtype=jnp.float32)
    out1 = jax.block_until_ready(neural_approp_rule(yt1, rt1, w1, b1, w2, b2))
    ref1 = _reference(yt1, rt1, w1, b1, w2, b2)
    assert out1.shape == (N1, 1)
    assert jnp.allclose(out1, ref1, atol=TOL, rtol=TOL), (out1, ref1)

    # Case 2: multiple row tiles (small tile_rows forces a >1 grid with pipelined DMAs).
    N2 = 2053
    yt2 = jax.random.normal(jax.random.fold_in(k_yt, 1), (N2,), dtype=jnp.float32)
    rt2 = jax.random.uniform(jax.random.fold_in(k_rt, 1), (N2,),
                             minval=0.5, maxval=1.5, dtype=jnp.float32)
    out2 = jax.block_until_ready(neural_approp_rule(yt2, rt2, w1, b1, w2, b2, tile_rows=8))
    ref2 = _reference(yt2, rt2, w1, b1, w2, b2)
    assert out2.shape == (N2, 1)
    assert jnp.allclose(out2, ref2, atol=TOL, rtol=TOL), (out2, ref2)

    print("KERNEL_OK")
</pallas_src>

<mosaic_0001>
module attributes {stable_mosaic.version = 11 : i64} {
  func.func @_neural_approp_kernel(%arg0: i32, %arg1: memref<8x128xf32, #tpu.memory_space<vmem>>, %arg2: memref<8x128xf32, #tpu.memory_space<vmem>>, %arg3: memref<10x10xf32, #tpu.memory_space<smem>>, %arg4: memref<10xf32, #tpu.memory_space<smem>>, %arg5: memref<10xf32, #tpu.memory_space<smem>>, %arg6: memref<1xf32, #tpu.memory_space<smem>>, %arg7: memref<8x128xf32, #tpu.memory_space<vmem>>) attributes {dimension_semantics = [#tpu.dimension_semantics<parallel>], iteration_bounds = array<i64: 1>, scalar_prefetch = 0 : i64, scratch_operands = 0 : i64, tpu.core_type = #tpu.core_type<tc>, window_params = [{transform_indices = @transform_0, window_bounds = array<i64: 8, 128>}, {transform_indices = @transform_1, window_bounds = array<i64: 8, 128>}, {transform_indices = @transform_2, window_bounds = array<i64: 10, 10>}, {transform_indices = @transform_3, window_bounds = array<i64: 10>}, {transform_indices = @transform_4, window_bounds = array<i64: 10>}, {transform_indices = @transform_5, window_bounds = array<i64: 1>}, {transform_indices = @transform_6, window_bounds = array<i64: 8, 128>}]} {
    %c0 = arith.constant 0 : index
    %c0_0 = arith.constant 0 : index
    %0 = vector.load %arg1[%c0, %c0_0] : memref<8x128xf32, #tpu.memory_space<vmem>>, vector<8x128xf32>
    %c0_1 = arith.constant 0 : index
    %c0_2 = arith.constant 0 : index
    %1 = vector.load %arg2[%c0_1, %c0_2] : memref<8x128xf32, #tpu.memory_space<vmem>>, vector<8x128xf32>
    %2 = arith.mulf %0, %1 : vector<8x128xf32>
    %3 = arith.mulf %0, %0 : vector<8x128xf32>
    %4 = arith.mulf %0, %2 : vector<8x128xf32>
    %5 = arith.mulf %2, %2 : vector<8x128xf32>
    %6 = arith.mulf %3, %0 : vector<8x128xf32>
    %7 = arith.mulf %3, %2 : vector<8x128xf32>
    %8 = arith.mulf %5, %0 : vector<8x128xf32>
    %9 = arith.mulf %5, %2 : vector<8x128xf32>
    %c0_3 = arith.constant 0 : index
    %10 = memref.load %arg6[%c0_3] : memref<1xf32, #tpu.memory_space<smem>>
    %c0_4 = arith.constant 0 : index
    %11 = memref.load %arg4[%c0_4] : memref<10xf32, #tpu.memory_space<smem>>
    %c0_5 = arith.constant 0 : index
    %c0_6 = arith.constant 0 : index
    %12 = memref.load %arg3[%c0_5, %c0_6] : memref<10x10xf32, #tpu.memory_space<smem>>
    %13 = arith.addf %11, %12 : f32
    %c1 = arith.constant 1 : index
    %c0_7 = arith.constant 0 : index
    %14 = memref.load %arg3[%c1, %c0_7] : memref<10x10xf32, #tpu.memory_space<smem>>
    %15 = vector.broadcast %14 : f32 to vector<8x128xf32>
    %16 = arith.mulf %15, %0 : vector<8x128xf32>
    %17 = vector.broadcast %13 : f32 to vector<8x128xf32>
    %18 = arith.addf %17, %16 : vector<8x128xf32>
    %c2 = arith.constant 2 : index
    %c0_8 = arith.constant 0 : index
    %19 = memref.load %arg3[%c2, %c0_8] : memref<10x10xf32, #tpu.memory_space<smem>>
    %20 = vector.broadcast %19 : f32 to vector<8x128xf32>
    %21 = arith.mulf %20, %2 : vector<8x128xf32>
    %22 = arith.addf %18, %21 : vector<8x128xf32>
    %c3 = arith.constant 3 : index
    %c0_9 = arith.constant 0 : index
    %23 = memref.load %arg3[%c3, %c0_9] : memref<10x10xf32, #tpu.memory_space<smem>>
    %24 = vector.broadcast %23 : f32 to vector<8x128xf32>
    %25 = arith.mulf %24, %3 : vector<8x128xf32>
    %26 = arith.addf %22, %25 : vector<8x128xf32>
    %c4 = arith.constant 4 : index
    %c0_10 = arith.constant 0 : index
    %27 = memref.load %arg3[%c4, %c0_10] : memref<10x10xf32, #tpu.memory_space<smem>>
    %28 = vector.broadcast %27 : f32 to vector<8x128xf32>
    %29 = arith.mulf %28, %4 : vector<8x128xf32>
    %30 = arith.addf %26, %29 : vector<8x128xf32>
    %c5 = arith.constant 5 : index
    %c0_11 = arith.constant 0 : index
    %31 = memref.load %arg3[%c5, %c0_11] : memref<10x10xf32, #tpu.memory_space<smem>>
    %32 = vector.broadcast %31 : f32 to vector<8x128xf32>
    %33 = arith.mulf %32, %5 : vector<8x128xf32>
    %34 = arith.addf %30, %33 : vector<8x128xf32>
    %c6 = arith.constant 6 : index
    %c0_12 = arith.constant 0 : index
    %35 = memref.load %arg3[%c6, %c0_12] : memref<10x10xf32, #tpu.memory_space<smem>>
    %36 = vector.broadcast %35 : f32 to vector<8x128xf32>
    %37 = arith.mulf %36, %6 : vector<8x128xf32>
    %38 = arith.addf %34, %37 : vector<8x128xf32>
    %c7 = arith.constant 7 : index
    %c0_13 = arith.constant 0 : index
    %39 = memref.load %arg3[%c7, %c0_13] : memref<10x10xf32, #tpu.memory_space<smem>>
    %40 = vector.broadcast %39 : f32 to vector<8x128xf32>
    %41 = arith.mulf %40, %7 : vector<8x128xf32>
    %42 = arith.addf %38, %41 : vector<8x128xf32>
    %c8 = arith.constant 8 : index
    %c0_14 = arith.constant 0 : index
    %43 = memref.load %arg3[%c8, %c0_14] : memref<10x10xf32, #tpu.memory_space<smem>>
    %44 = vector.broadcast %43 : f32 to vector<8x128xf32>
    %45 = arith.mulf %44, %8 : vector<8x128xf32>
    %46 = arith.addf %42, %45 : vector<8x128xf32>
    %c9 = arith.constant 9 : index
    %c0_15 = arith.constant 0 : index
    %47 = memref.load %arg3[%c9, %c0_15] : memref<10x10xf32, #tpu.memory_space<smem>>
    %48 = vector.broadcast %47 : f32 to vector<8x128xf32>
    %49 = arith.mulf %48, %9 : vector<8x128xf32>
    %50 = arith.addf %46, %49 : vector<8x128xf32>
    %cst = arith.constant 0.000000e+00 : f32
    %51 = vector.broadcast %cst : f32 to vector<8x128xf32>
    %52 = arith.maximumf %50, %51 : vector<8x128xf32>
    %c0_16 = arith.constant 0 : index
    %53 = memref.load %arg5[%c0_16] : memref<10xf32, #tpu.memory_space<smem>>
    %54 = vector.broadcast %53 : f32 to vector<8x128xf32>
    %55 = arith.mulf %54, %52 : vector<8x128xf32>
    %56 = vector.broadcast %10 : f32 to vector<8x128xf32>
    %57 = arith.addf %56, %55 : vector<8x128xf32>
    %c1_17 = arith.constant 1 : index
    %58 = memref.load %arg4[%c1_17] : memref<10xf32, #tpu.memory_space<smem>>
    %c0_18 = arith.constant 0 : index
    %c1_19 = arith.constant 1 : index
    %59 = memref.load %arg3[%c0_18, %c1_19] : memref<10x10xf32, #tpu.memory_space<smem>>
    %60 = arith.addf %58, %59 : f32
    %c1_20 = arith.constant 1 : index
    %c1_21 = arith.constant 1 : index
    %61 = memref.load %arg3[%c1_20, %c1_21] : memref<10x10xf32, #tpu.memory_space<smem>>
    %62 = vector.broadcast %61 : f32 to vector<8x128xf32>
    %63 = arith.mulf %62, %0 : vector<8x128xf32>
    %64 = vector.broadcast %60 : f32 to vector<8x128xf32>
    %65 = arith.addf %64, %63 : vector<8x128xf32>
    %c2_22 = arith.constant 2 : index
    %c1_23 = arith.constant 1 : index
    %66 = memref.load %arg3[%c2_22, %c1_23] : memref<10x10xf32, #tpu.memory_space<smem>>
    %67 = vector.broadcast %66 : f32 to vector<8x128xf32>
    %68 = arith.mulf %67, %2 : vector<8x128xf32>
    %69 = arith.addf %65, %68 : vector<8x128xf32>
    %c3_24 = arith.constant 3 : index
    %c1_25 = arith.constant 1 : index
    %70 = memref.load %arg3[%c3_24, %c1_25] : memref<10x10xf32, #tpu.memory_space<smem>>
    %71 = vector.broadcast %70 : f32 to vector<8x128xf32>
    %72 = arith.mulf %71, %3 : vector<8x128xf32>
    %73 = arith.addf %69, %72 : vector<8x128xf32>
    %c4_26 = arith.constant 4 : index
    %c1_27 = arith.constant 1 : index
    %74 = memref.load %arg3[%c4_26, %c1_27] : memref<10x10xf32, #tpu.memory_space<smem>>
    %75 = vector.broadcast %74 : f32 to vector<8x128xf32>
    %76 = arith.mulf %75, %4 : vector<8x128xf32>
    %77 = arith.addf %73, %76 : vector<8x128xf32>
    %c5_28 = arith.constant 5 : index
    %c1_29 = arith.constant 1 : index
    %78 = memref.load %arg3[%c5_28, %c1_29] : memref<10x10xf32, #tpu.memory_space<smem>>
    %79 = vector.broadcast %78 : f32 to vector<8x128xf32>
    %80 = arith.mulf %79, %5 : vector<8x128xf32>
    %81 = arith.addf %77, %80 : vector<8x128xf32>
    %c6_30 = arith.constant 6 : index
    %c1_31 = arith.constant 1 : index
    %82 = memref.load %arg3[%c6_30, %c1_31] : memref<10x10xf32, #tpu.memory_space<smem>>
    %83 = vector.broadcast %82 : f32 to vector<8x128xf32>
    %84 = arith.mulf %83, %6 : vector<8x128xf32>
    %85 = arith.addf %81, %84 : vector<8x128xf32>
    %c7_32 = arith.constant 7 : index
    %c1_33 = arith.constant 1 : index
    %86 = memref.load %arg3[%c7_32, %c1_33] : memref<10x10xf32, #tpu.memory_space<smem>>
    %87 = vector.broadcast %86 : f32 to vector<8x128xf32>
    %88 = arith.mulf %87, %7 : vector<8x128xf32>
    %89 = arith.addf %85, %88 : vector<8x128xf32>
    %c8_34 = arith.constant 8 : index
    %c1_35 = arith.constant 1 : index
    %90 = memref.load %arg3[%c8_34, %c1_35] : memref<10x10xf32, #tpu.memory_space<smem>>
    %91 = vector.broadcast %90 : f32 to vector<8x128xf32>
    %92 = arith.mulf %91, %8 : vector<8x128xf32>
    %93 = arith.addf %89, %92 : vector<8x128xf32>
    %c9_36 = arith.constant 9 : index
    %c1_37 = arith.constant 1 : index
    %94 = memref.load %arg3[%c9_36, %c1_37] : memref<10x10xf32, #tpu.memory_space<smem>>
    %95 = vector.broadcast %94 : f32 to vector<8x128xf32>
    %96 = arith.mulf %95, %9 : vector<8x128xf32>
    %97 = arith.addf %93, %96 : vector<8x128xf32>
    %cst_38 = arith.constant 0.000000e+00 : f32
    %98 = vector.broadcast %cst_38 : f32 to vector<8x128xf32>
    %99 = arith.maximumf %97, %98 : vector<8x128xf32>
    %c1_39 = arith.constant 1 : index
    %100 = memref.load %arg5[%c1_39] : memref<10xf32, #tpu.memory_space<smem>>
    %101 = vector.broadcast %100 : f32 to vector<8x128xf32>
    %102 = arith.mulf %101, %99 : vector<8x128xf32>
    %103 = arith.addf %57, %102 : vector<8x128xf32>
    %c2_40 = arith.constant 2 : index
    %104 = memref.load %arg4[%c2_40] : memref<10xf32, #tpu.memory_space<smem>>
    %c0_41 = arith.constant 0 : index
    %c2_42 = arith.constant 2 : index
    %105 = memref.load %arg3[%c0_41, %c2_42] : memref<10x10xf32, #tpu.memory_space<smem>>
    %106 = arith.addf %104, %105 : f32
    %c1_43 = arith.constant 1 : index
    %c2_44 = arith.constant 2 : index
    %107 = memref.load %arg3[%c1_43, %c2_44] : memref<10x10xf32, #tpu.memory_space<smem>>
    %108 = vector.broadcast %107 : f32 to vector<8x128xf32>
    %109 = arith.mulf %108, %0 : vector<8x128xf32>
    %110 = vector.broadcast %106 : f32 to vector<8x128xf32>
    %111 = arith.addf %110, %109 : vector<8x128xf32>
    %c2_45 = arith.constant 2 : index
    %c2_46 = arith.constant 2 : index
    %112 = memref.load %arg3[%c2_45, %c2_46] : memref<10x10xf32, #tpu.memory_space<smem>>
    %113 = vector.broadcast %112 : f32 to vector<8x128xf32>
    %114 = arith.mulf %113, %2 : vector<8x128xf32>
    %115 = arith.addf %111, %114 : vector<8x128xf32>
    %c3_47 = arith.constant 3 : index
    %c2_48 = arith.constant 2 : index
    %116 = memref.load %arg3[%c3_47, %c2_48] : memref<10x10xf32, #tpu.memory_space<smem>>
    %117 = vector.broadcast %116 : f32 to vector<8x128xf32>
    %118 = arith.mulf %117, %3 : vector<8x128xf32>
    %119 = arith.addf %115, %118 : vector<8x128xf32>
    %c4_49 = arith.constant 4 : index
    %c2_50 = arith.constant 2 : index
    %120 = memref.load %arg3[%c4_49, %c2_50] : memref<10x10xf32, #tpu.memory_space<smem>>
    %121 = vector.broadcast %120 : f32 to vector<8x128xf32>
    %122 = arith.mulf %121, %4 : vector<8x128xf32>
    %123 = arith.addf %119, %122 : vector<8x128xf32>
    %c5_51 = arith.constant 5 : index
    %c2_52 = arith.constant 2 : index
    %124 = memref.load %arg3[%c5_51, %c2_52] : memref<10x10xf32, #tpu.memory_space<smem>>
    %125 = vector.broadcast %124 : f32 to vector<8x128xf32>
    %126 = arith.mulf %125, %5 : vector<8x128xf32>
    %127 = arith.addf %123, %126 : vector<8x128xf32>
    %c6_53 = arith.constant 6 : index
    %c2_54 = arith.constant 2 : index
    %128 = memref.load %arg3[%c6_53, %c2_54] : memref<10x10xf32, #tpu.memory_space<smem>>
    %129 = vector.broadcast %128 : f32 to vector<8x128xf32>
    %130 = arith.mulf %129, %6 : vector<8x128xf32>
    %131 = arith.addf %127, %130 : vector<8x128xf32>
    %c7_55 = arith.constant 7 : index
    %c2_56 = arith.constant 2 : index
    %132 = memref.load %arg3[%c7_55, %c2_56] : memref<10x10xf32, #tpu.memory_space<smem>>
    %133 = vector.broadcast %132 : f32 to vector<8x128xf32>
    %134 = arith.mulf %133, %7 : vector<8x128xf32>
    %135 = arith.addf %131, %134 : vector<8x128xf32>
    %c8_57 = arith.constant 8 : index
    %c2_58 = arith.constant 2 : index
    %136 = memref.load %arg3[%c8_57, %c2_58] : memref<10x10xf32, #tpu.memory_space<smem>>
    %137 = vector.broadcast %136 : f32 to vector<8x128xf32>
    %138 = arith.mulf %137, %8 : vector<8x128xf32>
    %139 = arith.addf %135, %138 : vector<8x128xf32>
    %c9_59 = arith.constant 9 : index
    %c2_60 = arith.constant 2 : index
    %140 = memref.load %arg3[%c9_59, %c2_60] : memref<10x10xf32, #tpu.memory_space<smem>>
    %141 = vector.broadcast %140 : f32 to vector<8x128xf32>
    %142 = arith.mulf %141, %9 : vector<8x128xf32>
    %143 = arith.addf %139, %142 : vector<8x128xf32>
    %cst_61 = arith.constant 0.000000e+00 : f32
    %144 = vector.broadcast %cst_61 : f32 to vector<8x128xf32>
    %145 = arith.maximumf %143, %144 : vector<8x128xf32>
    %c2_62 = arith.constant 2 : index
    %146 = memref.load %arg5[%c2_62] : memref<10xf32, #tpu.memory_space<smem>>
    %147 = vector.broadcast %146 : f32 to vector<8x128xf32>
    %148 = arith.mulf %147, %145 : vector<8x128xf32>
    %149 = arith.addf %103, %148 : vector<8x128xf32>
    %c3_63 = arith.constant 3 : index
    %150 = memref.load %arg4[%c3_63] : memref<10xf32, #tpu.memory_space<smem>>
    %c0_64 = arith.constant 0 : index
    %c3_65 = arith.constant 3 : index
    %151 = memref.load %arg3[%c0_64, %c3_65] : memref<10x10xf32, #tpu.memory_space<smem>>
    %152 = arith.addf %150, %151 : f32
    %c1_66 = arith.constant 1 : index
    %c3_67 = arith.constant 3 : index
    %153 = memref.load %arg3[%c1_66, %c3_67] : memref<10x10xf32, #tpu.memory_space<smem>>
    %154 = vector.broadcast %153 : f32 to vector<8x128xf32>
    %155 = arith.mulf %154, %0 : vector<8x128xf32>
    %156 = vector.broadcast %152 : f32 to vector<8x128xf32>
    %157 = arith.addf %156, %155 : vector<8x128xf32>
    %c2_68 = arith.constant 2 : index
    %c3_69 = arith.constant 3 : index
    %158 = memref.load %arg3[%c2_68, %c3_69] : memref<10x10xf32, #tpu.memory_space<smem>>
    %159 = vector.broadcast %158 : f32 to vector<8x128xf32>
    %160 = arith.mulf %159, %2 : vector<8x128xf32>
    %161 = arith.addf %157, %160 : vector<8x128xf32>
    %c3_70 = arith.constant 3 : index
    %c3_71 = arith.constant 3 : index
    %162 = memref.load %arg3[%c3_70, %c3_71] : memref<10x10xf32, #tpu.memory_space<smem>>
    %163 = vector.broadcast %162 : f32 to vector<8x128xf32>
    %164 = arith.mulf %163, %3 : vector<8x128xf32>
    %165 = arith.addf %161, %164 : vector<8x128xf32>
    %c4_72 = arith.constant 4 : index
    %c3_73 = arith.constant 3 : index
    %166 = memref.load %arg3[%c4_72, %c3_73] : memref<10x10xf32, #tpu.memory_space<smem>>
    %167 = vector.broadcast %166 : f32 to vector<8x128xf32>
    %168 = arith.mulf %167, %4 : vector<8x128xf32>
    %169 = arith.addf %165, %168 : vector<8x128xf32>
    %c5_74 = arith.constant 5 : index
    %c3_75 = arith.constant 3 : index
    %170 = memref.load %arg3[%c5_74, %c3_75] : memref<10x10xf32, #tpu.memory_space<smem>>
    %171 = vector.broadcast %170 : f32 to vector<8x128xf32>
    %172 = arith.mulf %171, %5 : vector<8x128xf32>
    %173 = arith.addf %169, %172 : vector<8x128xf32>
    %c6_76 = arith.constant 6 : index
    %c3_77 = arith.constant 3 : index
    %174 = memref.load %arg3[%c6_76, %c3_77] : memref<10x10xf32, #tpu.memory_space<smem>>
    %175 = vector.broadcast %174 : f32 to vector<8x128xf32>
    %176 = arith.mulf %175, %6 : vector<8x128xf32>
    %177 = arith.addf %173, %176 : vector<8x128xf32>
    %c7_78 = arith.constant 7 : index
    %c3_79 = arith.constant 3 : index
    %178 = memref.load %arg3[%c7_78, %c3_79] : memref<10x10xf32, #tpu.memory_space<smem>>
    %179 = vector.broadcast %178 : f32 to vector<8x128xf32>
    %180 = arith.mulf %179, %7 : vector<8x128xf32>
    %181 = arith.addf %177, %180 : vector<8x128xf32>
    %c8_80 = arith.constant 8 : index
    %c3_81 = arith.constant 3 : index
    %182 = memref.load %arg3[%c8_80, %c3_81] : memref<10x10xf32, #tpu.memory_space<smem>>
    %183 = vector.broadcast %182 : f32 to vector<8x128xf32>
    %184 = arith.mulf %183, %8 : vector<8x128xf32>
    %185 = arith.addf %181, %184 : vector<8x128xf32>
    %c9_82 = arith.constant 9 : index
    %c3_83 = arith.constant 3 : index
    %186 = memref.load %arg3[%c9_82, %c3_83] : memref<10x10xf32, #tpu.memory_space<smem>>
    %187 = vector.broadcast %186 : f32 to vector<8x128xf32>
    %188 = arith.mulf %187, %9 : vector<8x128xf32>
    %189 = arith.addf %185, %188 : vector<8x128xf32>
    %cst_84 = arith.constant 0.000000e+00 : f32
    %190 = vector.broadcast %cst_84 : f32 to vector<8x128xf32>
    %191 = arith.maximumf %189, %190 : vector<8x128xf32>
    %c3_85 = arith.constant 3 : index
    %192 = memref.load %arg5[%c3_85] : memref<10xf32, #tpu.memory_space<smem>>
    %193 = vector.broadcast %192 : f32 to vector<8x128xf32>
    %194 = arith.mulf %193, %191 : vector<8x128xf32>
    %195 = arith.addf %149, %194 : vector<8x128xf32>
    %c4_86 = arith.constant 4 : index
    %196 = memref.load %arg4[%c4_86] : memref<10xf32, #tpu.memory_space<smem>>
    %c0_87 = arith.constant 0 : index
    %c4_88 = arith.constant 4 : index
    %197 = memref.load %arg3[%c0_87, %c4_88] : memref<10x10xf32, #tpu.memory_space<smem>>
    %198 = arith.addf %196, %197 : f32
    %c1_89 = arith.constant 1 : index
    %c4_90 = arith.constant 4 : index
    %199 = memref.load %arg3[%c1_89, %c4_90] : memref<10x10xf32, #tpu.memory_space<smem>>
    %200 = vector.broadcast %199 : f32 to vector<8x128xf32>
    %201 = arith.mulf %200, %0 : vector<8x128xf32>
    %202 = vector.broadcast %198 : f32 to vector<8x128xf32>
    %203 = arith.addf %202, %201 : vector<8x128xf32>
    %c2_91 = arith.constant 2 : index
    %c4_92 = arith.constant 4 : index
    %204 = memref.load %arg3[%c2_91, %c4_92] : memref<10x10xf32, #tpu.memory_space<smem>>
    %205 = vector.broadcast %204 : f32 to vector<8x128xf32>
    %206 = arith.mulf %205, %2 : vector<8x128xf32>
    %207 = arith.addf %203, %206 : vector<8x128xf32>
    %c3_93 = arith.constant 3 : index
    %c4_94 = arith.constant 4 : index
    %208 = memref.load %arg3[%c3_93, %c4_94] : memref<10x10xf32, #tpu.memory_space<smem>>
    %209 = vector.broadcast %208 : f32 to vector<8x128xf32>
    %210 = arith.mulf %209, %3 : vector<8x128xf32>
    %211 = arith.addf %207, %210 : vector<8x128xf32>
    %c4_95 = arith.constant 4 : index
    %c4_96 = arith.constant 4 : index
    %212 = memref.load %arg3[%c4_95, %c4_96] : memref<10x10xf32, #tpu.memory_space<smem>>
    %213 = vector.broadcast %212 : f32 to vector<8x128xf32>
    %214 = arith.mulf %213, %4 : vector<8x128xf32>
    %215 = arith.addf %211, %214 : vector<8x128xf32>
    %c5_97 = arith.constant 5 : index
    %c4_98 = arith.constant 4 : index
    %216 = memref.load %arg3[%c5_97, %c4_98] : memref<10x10xf32, #tpu.memory_space<smem>>
    %217 = vector.broadcast %216 : f32 to vector<8x128xf32>
    %218 = arith.mulf %217, %5 : vector<8x128xf32>
    %219 = arith.addf %215, %218 : vector<8x128xf32>
    %c6_99 = arith.constant 6 : index
    %c4_100 = arith.constant 4 : index
    %220 = memref.load %arg3[%c6_99, %c4_100] : memref<10x10xf32, #tpu.memory_space<smem>>
    %221 = vector.broadcast %220 : f32 to vector<8x128xf32>
    %222 = arith.mulf %221, %6 : vector<8x128xf32>
    %223 = arith.addf %219, %222 : vector<8x128xf32>
    %c7_101 = arith.constant 7 : index
    %c4_102 = arith.constant 4 : index
    %224 = memref.load %arg3[%c7_101, %c4_102] : memref<10x10xf32, #tpu.memory_space<smem>>
    %225 = vector.broadcast %224 : f32 to vector<8x128xf32>
    %226 = arith.mulf %225, %7 : vector<8x128xf32>
    %227 = arith.addf %223, %226 : vector<8x128xf32>
    %c8_103 = arith.constant 8 : index
    %c4_104 = arith.constant 4 : index
    %228 = memref.load %arg3[%c8_103, %c4_104] : memref<10x10xf32, #tpu.memory_space<smem>>
    %229 = vector.broadcast %228 : f32 to vector<8x128xf32>
    %230 = arith.mulf %229, %8 : vector<8x128xf32>
    %231 = arith.addf %227, %230 : vector<8x128xf32>
    %c9_105 = arith.constant 9 : index
    %c4_106 = arith.constant 4 : index
    %232 = memref.load %arg3[%c9_105, %c4_106] : memref<10x10xf32, #tpu.memory_space<smem>>
    %233 = vector.broadcast %232 : f32 to vector<8x128xf32>
    %234 = arith.mulf %233, %9 : vector<8x128xf32>
    %235 = arith.addf %231, %234 : vector<8x128xf32>
    %cst_107 = arith.constant 0.000000e+00 : f32
    %236 = vector.broadcast %cst_107 : f32 to vector<8x128xf32>
    %237 = arith.maximumf %235, %236 : vector<8x128xf32>
    %c4_108 = arith.constant 4 : index
    %238 = memref.load %arg5[%c4_108] : memref<10xf32, #tpu.memory_space<smem>>
    %239 = vector.broadcast %238 : f32 to vector<8x128xf32>
    %240 = arith.mulf %239, %237 : vector<8x128xf32>
    %241 = arith.addf %195, %240 : vector<8x128xf32>
    %c5_109 = arith.constant 5 : index
    %242 = memref.load %arg4[%c5_109] : memref<10xf32, #tpu.memory_space<smem>>
    %c0_110 = arith.constant 0 : index
    %c5_111 = arith.constant 5 : index
    %243 = memref.load %arg3[%c0_110, %c5_111] : memref<10x10xf32, #tpu.memory_space<smem>>
    %244 = arith.addf %242, %243 : f32
    %c1_112 = arith.constant 1 : index
    %c5_113 = arith.constant 5 : index
    %245 = memref.load %arg3[%c1_112, %c5_113] : memref<10x10xf32, #tpu.memory_space<smem>>
    %246 = vector.broadcast %245 : f32 to vector<8x128xf32>
    %247 = arith.mulf %246, %0 : vector<8x128xf32>
    %248 = vector.broadcast %244 : f32 to vector<8x128xf32>
    %249 = arith.addf %248, %247 : vector<8x128xf32>
    %c2_114 = arith.constant 2 : index
    %c5_115 = arith.constant 5 : index
    %250 = memref.load %arg3[%c2_114, %c5_115] : memref<10x10xf32, #tpu.memory_space<smem>>
    %251 = vector.broadcast %250 : f32 to vector<8x128xf32>
    %252 = arith.mulf %251, %2 : vector<8x128xf32>
    %253 = arith.addf %249, %252 : vector<8x128xf32>
    %c3_116 = arith.constant 3 : index
    %c5_117 = arith.constant 5 : index
    %254 = memref.load %arg3[%c3_116, %c5_117] : memref<10x10xf32, #tpu.memory_space<smem>>
    %255 = vector.broadcast %254 : f32 to vector<8x128xf32>
    %256 = arith.mulf %255, %3 : vector<8x128xf32>
    %257 = arith.addf %253, %256 : vector<8x128xf32>
    %c4_118 = arith.constant 4 : index
    %c5_119 = arith.constant 5 : index
    %258 = memref.load %arg3[%c4_118, %c5_119] : memref<10x10xf32, #tpu.memory_space<smem>>
    %259 = vector.broadcast %258 : f32 to vector<8x128xf32>
    %260 = arith.mulf %259, %4 : vector<8x128xf32>
    %261 = arith.addf %257, %260 : vector<8x128xf32>
    %c5_120 = arith.constant 5 : index
    %c5_121 = arith.constant 5 : index
    %262 = memref.load %arg3[%c5_120, %c5_121] : memref<10x10xf32, #tpu.memory_space<smem>>
    %263 = vector.broadcast %262 : f32 to vector<8x128xf32>
    %264 = arith.mulf %263, %5 : vector<8x128xf32>
    %265 = arith.addf %261, %264 : vector<8x128xf32>
    %c6_122 = arith.constant 6 : index
    %c5_123 = arith.constant 5 : index
    %266 = memref.load %arg3[%c6_122, %c5_123] : memref<10x10xf32, #tpu.memory_space<smem>>
    %267 = vector.broadcast %266 : f32 to vector<8x128xf32>
    %268 = arith.mulf %267, %6 : vector<8x128xf32>
    %269 = arith.addf %265, %268 : vector<8x128xf32>
    %c7_124 = arith.constant 7 : index
    %c5_125 = arith.constant 5 : index
    %270 = memref.load %arg3[%c7_124, %c5_125] : memref<10x10xf32, #tpu.memory_space<smem>>
    %271 = vector.broadcast %270 : f32 to vector<8x128xf32>
    %272 = arith.mulf %271, %7 : vector<8x128xf32>
    %273 = arith.addf %269, %272 : vector<8x128xf32>
    %c8_126 = arith.constant 8 : index
    %c5_127 = arith.constant 5 : index
    %274 = memref.load %arg3[%c8_126, %c5_127] : memref<10x10xf32, #tpu.memory_space<smem>>
    %275 = vector.broadcast %274 : f32 to vector<8x128xf32>
    %276 = arith.mulf %275, %8 : vector<8x128xf32>
    %277 = arith.addf %273, %276 : vector<8x128xf32>
    %c9_128 = arith.constant 9 : index
    %c5_129 = arith.constant 5 : index
    %278 = memref.load %arg3[%c9_128, %c5_129] : memref<10x10xf32, #tpu.memory_space<smem>>
    %279 = vector.broadcast %278 : f32 to vector<8x128xf32>
    %280 = arith.mulf %279, %9 : vector<8x128xf32>
    %281 = arith.addf %277, %280 : vector<8x128xf32>
    %cst_130 = arith.constant 0.000000e+00 : f32
    %282 = vector.broadcast %cst_130 : f32 to vector<8x128xf32>
    %283 = arith.maximumf %281, %282 : vector<8x128xf32>
    %c5_131 = arith.constant 5 : index
    %284 = memref.load %arg5[%c5_131] : memref<10xf32, #tpu.memory_space<smem>>
    %285 = vector.broadcast %284 : f32 to vector<8x128xf32>
    %286 = arith.mulf %285, %283 : vector<8x128xf32>
    %287 = arith.addf %241, %286 : vector<8x128xf32>
    %c6_132 = arith.constant 6 : index
    %288 = memref.load %arg4[%c6_132] : memref<10xf32, #tpu.memory_space<smem>>
    %c0_133 = arith.constant 0 : index
    %c6_134 = arith.constant 6 : index
    %289 = memref.load %arg3[%c0_133, %c6_134] : memref<10x10xf32, #tpu.memory_space<smem>>
    %290 = arith.addf %288, %289 : f32
    %c1_135 = arith.constant 1 : index
    %c6_136 = arith.constant 6 : index
    %291 = memref.load %arg3[%c1_135, %c6_136] : memref<10x10xf32, #tpu.memory_space<smem>>
    %292 = vector.broadcast %291 : f32 to vector<8x128xf32>
    %293 = arith.mulf %292, %0 : vector<8x128xf32>
    %294 = vector.broadcast %290 : f32 to vector<8x128xf32>
    %295 = arith.addf %294, %293 : vector<8x128xf32>
    %c2_137 = arith.constant 2 : index
    %c6_138 = arith.constant 6 : index
    %296 = memref.load %arg3[%c2_137, %c6_138] : memref<10x10xf32, #tpu.memory_space<smem>>
    %297 = vector.broadcast %296 : f32 to vector<8x128xf32>
    %298 = arith.mulf %297, %2 : vector<8x128xf32>
    %299 = arith.addf %295, %298 : vector<8x128xf32>
    %c3_139 = arith.constant 3 : index
    %c6_140 = arith.constant 6 : index
    %300 = memref.load %arg3[%c3_139, %c6_140] : memref<10x10xf32, #tpu.memory_space<smem>>
    %301 = vector.broadcast %300 : f32 to vector<8x128xf32>
    %302 = arith.mulf %301, %3 : vector<8x128xf32>
    %303 = arith.addf %299, %302 : vector<8x128xf32>
    %c4_141 = arith.constant 4 : index
    %c6_142 = arith.constant 6 : index
    %304 = memref.load %arg3[%c4_141, %c6_142] : memref<10x10xf32, #tpu.memory_space<smem>>
    %305 = vector.broadcast %304 : f32 to vector<8x128xf32>
    %306 = arith.mulf %305, %4 : vector<8x128xf32>
    %307 = arith.addf %303, %306 : vector<8x128xf32>
    %c5_143 = arith.constant 5 : index
    %c6_144 = arith.constant 6 : index
    %308 = memref.load %arg3[%c5_143, %c6_144] : memref<10x10xf32, #tpu.memory_space<smem>>
    %309 = vector.broadcast %308 : f32 to vector<8x128xf32>
    %310 = arith.mulf %309, %5 : vector<8x128xf32>
    %311 = arith.addf %307, %310 : vector<8x128xf32>
    %c6_145 = arith.constant 6 : index
    %c6_146 = arith.constant 6 : index
    %312 = memref.load %arg3[%c6_145, %c6_146] : memref<10x10xf32, #tpu.memory_space<smem>>
    %313 = vector.broadcast %312 : f32 to vector<8x128xf32>
    %314 = arith.mulf %313, %6 : vector<8x128xf32>
    %315 = arith.addf %311, %314 : vector<8x128xf32>
    %c7_147 = arith.constant 7 : index
    %c6_148 = arith.constant 6 : index
    %316 = memref.load %arg3[%c7_147, %c6_148] : memref<10x10xf32, #tpu.memory_space<smem>>
    %317 = vector.broadcast %316 : f32 to vector<8x128xf32>
    %318 = arith.mulf %317, %7 : vector<8x128xf32>
    %319 = arith.addf %315, %318 : vector<8x128xf32>
    %c8_149 = arith.constant 8 : index
    %c6_150 = arith.constant 6 : index
    %320 = memref.load %arg3[%c8_149, %c6_150] : memref<10x10xf32, #tpu.memory_space<smem>>
    %321 = vector.broadcast %320 : f32 to vector<8x128xf32>
    %322 = arith.mulf %321, %8 : vector<8x128xf32>
    %323 = arith.addf %319, %322 : vector<8x128xf32>
    %c9_151 = arith.constant 9 : index
    %c6_152 = arith.constant 6 : index
    %324 = memref.load %arg3[%c9_151, %c6_152] : memref<10x10xf32, #tpu.memory_space<smem>>
    %325 = vector.broadcast %324 : f32 to vector<8x128xf32>
    %326 = arith.mulf %325, %9 : vector<8x128xf32>
    %327 = arith.addf %323, %326 : vector<8x128xf32>
    %cst_153 = arith.constant 0.000000e+00 : f32
    %328 = vector.broadcast %cst_153 : f32 to vector<8x128xf32>
    %329 = arith.maximumf %327, %328 : vector<8x128xf32>
    %c6_154 = arith.constant 6 : index
    %330 = memref.load %arg5[%c6_154] : memref<10xf32, #tpu.memory_space<smem>>
    %331 = vector.broadcast %330 : f32 to vector<8x128xf32>
    %332 = arith.mulf %331, %329 : vector<8x128xf32>
    %333 = arith.addf %287, %332 : vector<8x128xf32>
    %c7_155 = arith.constant 7 : index
    %334 = memref.load %arg4[%c7_155] : memref<10xf32, #tpu.memory_space<smem>>
    %c0_156 = arith.constant 0 : index
    %c7_157 = arith.constant 7 : index
    %335 = memref.load %arg3[%c0_156, %c7_157] : memref<10x10xf32, #tpu.memory_space<smem>>
    %336 = arith.addf %334, %335 : f32
    %c1_158 = arith.constant 1 : index
    %c7_159 = arith.constant 7 : index
    %337 = memref.load %arg3[%c1_158, %c7_159] : memref<10x10xf32, #tpu.memory_space<smem>>
    %338 = vector.broadcast %337 : f32 to vector<8x128xf32>
    %339 = arith.mulf %338, %0 : vector<8x128xf32>
    %340 = vector.broadcast %336 : f32 to vector<8x128xf32>
    %341 = arith.addf %340, %339 : vector<8x128xf32>
    %c2_160 = arith.constant 2 : index
    %c7_161 = arith.constant 7 : index
    %342 = memref.load %arg3[%c2_160, %c7_161] : memref<10x10xf32, #tpu.memory_space<smem>>
    %343 = vector.broadcast %342 : f32 to vector<8x128xf32>
    %344 = arith.mulf %343, %2 : vector<8x128xf32>
    %345 = arith.addf %341, %344 : vector<8x128xf32>
    %c3_162 = arith.constant 3 : index
    %c7_163 = arith.constant 7 : index
    %346 = memref.load %arg3[%c3_162, %c7_163] : memref<10x10xf32, #tpu.memory_space<smem>>
    %347 = vector.broadcast %346 : f32 to vector<8x128xf32>
    %348 = arith.mulf %347, %3 : vector<8x128xf32>
    %349 = arith.addf %345, %348 : vector<8x128xf32>
    %c4_164 = arith.constant 4 : index
    %c7_165 = arith.constant 7 : index
    %350 = memref.load %arg3[%c4_164, %c7_165] : memref<10x10xf32, #tpu.memory_space<smem>>
    %351 = vector.broadcast %350 : f32 to vector<8x128xf32>
    %352 = arith.mulf %351, %4 : vector<8x128xf32>
    %353 = arith.addf %349, %352 : vector<8x128xf32>
    %c5_166 = arith.constant 5 : index
    %c7_167 = arith.constant 7 : index
    %354 = memref.load %arg3[%c5_166, %c7_167] : memref<10x10xf32, #tpu.memory_space<smem>>
    %355 = vector.broadcast %354 : f32 to vector<8x128xf32>
    %356 = arith.mulf %355, %5 : vector<8x128xf32>
    %357 = arith.addf %353, %356 : vector<8x128xf32>
    %c6_168 = arith.constant 6 : index
    %c7_169 = arith.constant 7 : index
    %358 = memref.load %arg3[%c6_168, %c7_169] : memref<10x10xf32, #tpu.memory_space<smem>>
    %359 = vector.broadcast %358 : f32 to vector<8x128xf32>
    %360 = arith.mulf %359, %6 : vector<8x128xf32>
    %361 = arith.addf %357, %360 : vector<8x128xf32>
    %c7_170 = arith.constant 7 : index
    %c7_171 = arith.constant 7 : index
    %362 = memref.load %arg3[%c7_170, %c7_171] : memref<10x10xf32, #tpu.memory_space<smem>>
    %363 = vector.broadcast %362 : f32 to vector<8x128xf32>
    %364 = arith.mulf %363, %7 : vector<8x128xf32>
    %365 = arith.addf %361, %364 : vector<8x128xf32>
    %c8_172 = arith.constant 8 : index
    %c7_173 = arith.constant 7 : index
    %366 = memref.load %arg3[%c8_172, %c7_173] : memref<10x10xf32, #tpu.memory_space<smem>>
    %367 = vector.broadcast %366 : f32 to vector<8x128xf32>
    %368 = arith.mulf %367, %8 : vector<8x128xf32>
    %369 = arith.addf %365, %368 : vector<8x128xf32>
    %c9_174 = arith.constant 9 : index
    %c7_175 = arith.constant 7 : index
    %370 = memref.load %arg3[%c9_174, %c7_175] : memref<10x10xf32, #tpu.memory_space<smem>>
    %371 = vector.broadcast %370 : f32 to vector<8x128xf32>
    %372 = arith.mulf %371, %9 : vector<8x128xf32>
    %373 = arith.addf %369, %372 : vector<8x128xf32>
    %cst_176 = arith.constant 0.000000e+00 : f32
    %374 = vector.broadcast %cst_176 : f32 to vector<8x128xf32>
    %375 = arith.maximumf %373, %374 : vector<8x128xf32>
    %c7_177 = arith.constant 7 : index
    %376 = memref.load %arg5[%c7_177] : memref<10xf32, #tpu.memory_space<smem>>
    %377 = vector.broadcast %376 : f32 to vector<8x128xf32>
    %378 = arith.mulf %377, %375 : vector<8x128xf32>
    %379 = arith.addf %333, %378 : vector<8x128xf32>
    %c8_178 = arith.constant 8 : index
    %380 = memref.load %arg4[%c8_178] : memref<10xf32, #tpu.memory_space<smem>>
    %c0_179 = arith.constant 0 : index
    %c8_180 = arith.constant 8 : index
    %381 = memref.load %arg3[%c0_179, %c8_180] : memref<10x10xf32, #tpu.memory_space<smem>>
    %382 = arith.addf %380, %381 : f32
    %c1_181 = arith.constant 1 : index
    %c8_182 = arith.constant 8 : index
    %383 = memref.load %arg3[%c1_181, %c8_182] : memref<10x10xf32, #tpu.memory_space<smem>>
    %384 = vector.broadcast %383 : f32 to vector<8x128xf32>
    %385 = arith.mulf %384, %0 : vector<8x128xf32>
    %386 = vector.broadcast %382 : f32 to vector<8x128xf32>
    %387 = arith.addf %386, %385 : vector<8x128xf32>
    %c2_183 = arith.constant 2 : index
    %c8_184 = arith.constant 8 : index
    %388 = memref.load %arg3[%c2_183, %c8_184] : memref<10x10xf32, #tpu.memory_space<smem>>
    %389 = vector.broadcast %388 : f32 to vector<8x128xf32>
    %390 = arith.mulf %389, %2 : vector<8x128xf32>
    %391 = arith.addf %387, %390 : vector<8x128xf32>
    %c3_185 = arith.constant 3 : index
    %c8_186 = arith.constant 8 : index
    %392 = memref.load %arg3[%c3_185, %c8_186] : memref<10x10xf32, #tpu.memory_space<smem>>
    %393 = vector.broadcast %392 : f32 to vector<8x128xf32>
    %394 = arith.mulf %393, %3 : vector<8x128xf32>
    %395 = arith.addf %391, %394 : vector<8x128xf32>
    %c4_187 = arith.constant 4 : index
    %c8_188 = arith.constant 8 : index
    %396 = memref.load %arg3[%c4_187, %c8_188] : memref<10x10xf32, #tpu.memory_space<smem>>
    %397 = vector.broadcast %396 : f32 to vector<8x128xf32>
    %398 = arith.mulf %397, %4 : vector<8x128xf32>
    %399 = arith.addf %395, %398 : vector<8x128xf32>
    %c5_189 = arith.constant 5 : index
    %c8_190 = arith.constant 8 : index
    %400 = memref.load %arg3[%c5_189, %c8_190] : memref<10x10xf32, #tpu.memory_space<smem>>
    %401 = vector.broadcast %400 : f32 to vector<8x128xf32>
    %402 = arith.mulf %401, %5 : vector<8x128xf32>
    %403 = arith.addf %399, %402 : vector<8x128xf32>
    %c6_191 = arith.constant 6 : index
    %c8_192 = arith.constant 8 : index
    %404 = memref.load %arg3[%c6_191, %c8_192] : memref<10x10xf32, #tpu.memory_space<smem>>
    %405 = vector.broadcast %404 : f32 to vector<8x128xf32>
    %406 = arith.mulf %405, %6 : vector<8x128xf32>
    %407 = arith.addf %403, %406 : vector<8x128xf32>
    %c7_193 = arith.constant 7 : index
    %c8_194 = arith.constant 8 : index
    %408 = memref.load %arg3[%c7_193, %c8_194] : memref<10x10xf32, #tpu.memory_space<smem>>
    %409 = vector.broadcast %408 : f32 to vector<8x128xf32>
    %410 = arith.mulf %409, %7 : vector<8x128xf32>
    %411 = arith.addf %407, %410 : vector<8x128xf32>
    %c8_195 = arith.constant 8 : index
    %c8_196 = arith.constant 8 : index
    %412 = memref.load %arg3[%c8_195, %c8_196] : memref<10x10xf32, #tpu.memory_space<smem>>
    %413 = vector.broadcast %412 : f32 to vector<8x128xf32>
    %414 = arith.mulf %413, %8 : vector<8x128xf32>
    %415 = arith.addf %411, %414 : vector<8x128xf32>
    %c9_197 = arith.constant 9 : index
    %c8_198 = arith.constant 8 : index
    %416 = memref.load %arg3[%c9_197, %c8_198] : memref<10x10xf32, #tpu.memory_space<smem>>
    %417 = vector.broadcast %416 : f32 to vector<8x128xf32>
    %418 = arith.mulf %417, %9 : vector<8x128xf32>
    %419 = arith.addf %415, %418 : vector<8x128xf32>
    %cst_199 = arith.constant 0.000000e+00 : f32
    %420 = vector.broadcast %cst_199 : f32 to vector<8x128xf32>
    %421 = arith.maximumf %419, %420 : vector<8x128xf32>
    %c8_200 = arith.constant 8 : index
    %422 = memref.load %arg5[%c8_200] : memref<10xf32, #tpu.memory_space<smem>>
    %423 = vector.broadcast %422 : f32 to vector<8x128xf32>
    %424 = arith.mulf %423, %421 : vector<8x128xf32>
    %425 = arith.addf %379, %424 : vector<8x128xf32>
    %c9_201 = arith.constant 9 : index
    %426 = memref.load %arg4[%c9_201] : memref<10xf32, #tpu.memory_space<smem>>
    %c0_202 = arith.constant 0 : index
    %c9_203 = arith.constant 9 : index
    %427 = memref.load %arg3[%c0_202, %c9_203] : memref<10x10xf32, #tpu.memory_space<smem>>
    %428 = arith.addf %426, %427 : f32
    %c1_204 = arith.constant 1 : index
    %c9_205 = arith.constant 9 : index
    %429 = memref.load %arg3[%c1_204, %c9_205] : memref<10x10xf32, #tpu.memory_space<smem>>
    %430 = vector.broadcast %429 : f32 to vector<8x128xf32>
    %431 = arith.mulf %430, %0 : vector<8x128xf32>
    %432 = vector.broadcast %428 : f32 to vector<8x128xf32>
    %433 = arith.addf %432, %431 : vector<8x128xf32>
    %c2_206 = arith.constant 2 : index
    %c9_207 = arith.constant 9 : index
    %434 = memref.load %arg3[%c2_206, %c9_207] : memref<10x10xf32, #tpu.memory_space<smem>>
    %435 = vector.broadcast %434 : f32 to vector<8x128xf32>
    %436 = arith.mulf %435, %2 : vector<8x128xf32>
    %437 = arith.addf %433, %436 : vector<8x128xf32>
    %c3_208 = arith.constant 3 : index
    %c9_209 = arith.constant 9 : index
    %438 = memref.load %arg3[%c3_208, %c9_209] : memref<10x10xf32, #tpu.memory_space<smem>>
    %439 = vector.broadcast %438 : f32 to vector<8x128xf32>
    %440 = arith.mulf %439, %3 : vector<8x128xf32>
    %441 = arith.addf %437, %440 : vector<8x128xf32>
    %c4_210 = arith.constant 4 : index
    %c9_211 = arith.constant 9 : index
    %442 = memref.load %arg3[%c4_210, %c9_211] : memref<10x10xf32, #tpu.memory_space<smem>>
    %443 = vector.broadcast %442 : f32 to vector<8x128xf32>
    %444 = arith.mulf %443, %4 : vector<8x128xf32>
    %445 = arith.addf %441, %444 : vector<8x128xf32>
    %c5_212 = arith.constant 5 : index
    %c9_213 = arith.constant 9 : index
    %446 = memref.load %arg3[%c5_212, %c9_213] : memref<10x10xf32, #tpu.memory_space<smem>>
    %447 = vector.broadcast %446 : f32 to vector<8x128xf32>
    %448 = arith.mulf %447, %5 : vector<8x128xf32>
    %449 = arith.addf %445, %448 : vector<8x128xf32>
    %c6_214 = arith.constant 6 : index
    %c9_215 = arith.constant 9 : index
    %450 = memref.load %arg3[%c6_214, %c9_215] : memref<10x10xf32, #tpu.memory_space<smem>>
    %451 = vector.broadcast %450 : f32 to vector<8x128xf32>
    %452 = arith.mulf %451, %6 : vector<8x128xf32>
    %453 = arith.addf %449, %452 : vector<8x128xf32>
    %c7_216 = arith.constant 7 : index
    %c9_217 = arith.constant 9 : index
    %454 = memref.load %arg3[%c7_216, %c9_217] : memref<10x10xf32, #tpu.memory_space<smem>>
    %455 = vector.broadcast %454 : f32 to vector<8x128xf32>
    %456 = arith.mulf %455, %7 : vector<8x128xf32>
    %457 = arith.addf %453, %456 : vector<8x128xf32>
    %c8_218 = arith.constant 8 : index
    %c9_219 = arith.constant 9 : index
    %458 = memref.load %arg3[%c8_218, %c9_219] : memref<10x10xf32, #tpu.memory_space<smem>>
    %459 = vector.broadcast %458 : f32 to vector<8x128xf32>
    %460 = arith.mulf %459, %8 : vector<8x128xf32>
    %461 = arith.addf %457, %460 : vector<8x128xf32>
    %c9_220 = arith.constant 9 : index
    %c9_221 = arith.constant 9 : index
    %462 = memref.load %arg3[%c9_220, %c9_221] : memref<10x10xf32, #tpu.memory_space<smem>>
    %463 = vector.broadcast %462 : f32 to vector<8x128xf32>
    %464 = arith.mulf %463, %9 : vector<8x128xf32>
    %465 = arith.addf %461, %464 : vector<8x128xf32>
    %cst_222 = arith.constant 0.000000e+00 : f32
    %466 = vector.broadcast %cst_222 : f32 to vector<8x128xf32>
    %467 = arith.maximumf %465, %466 : vector<8x128xf32>
    %c9_223 = arith.constant 9 : index
    %468 = memref.load %arg5[%c9_223] : memref<10xf32, #tpu.memory_space<smem>>
    %469 = vector.broadcast %468 : f32 to vector<8x128xf32>
    %470 = arith.mulf %469, %467 : vector<8x128xf32>
    %471 = arith.addf %425, %470 : vector<8x128xf32>
    %cst_224 = arith.constant 0.000000e+00 : f32
    %472 = vector.broadcast %cst_224 : f32 to vector<8x128xf32>
    %473 = arith.subf %472, %471 : vector<8x128xf32>
    %474 = math.exp %473 : vector<8x128xf32>
    %cst_225 = arith.constant 1.000000e+00 : f32
    %475 = vector.broadcast %cst_225 : f32 to vector<8x128xf32>
    %476 = arith.addf %475, %474 : vector<8x128xf32>
    %477 = tpu.reciprocal %476 {approx = true} : vector<8x128xf32> -> vector<8x128xf32>
    %cst_226 = arith.constant 5.000000e+00 : f32
    %478 = vector.broadcast %cst_226 : f32 to vector<8x128xf32>
    %479 = arith.mulf %478, %477 : vector<8x128xf32>
    %c0_227 = arith.constant 0 : index
    %c0_228 = arith.constant 0 : index
    %480 = vector.load %arg7[%c0_227, %c0_228] : memref<8x128xf32, #tpu.memory_space<vmem>>, vector<8x128xf32>
    tpu.vector_store %arg7[%c0_227, %c0_228], %479 {strides = array<i32>} : memref<8x128xf32, #tpu.memory_space<vmem>>, vector<8x128xf32>,
    return
  }
  func.func @transform_0(%arg0: i32) -> (i32, i32) {
    %c0_i32 = arith.constant 0 : i32
    %c0_i32_0 = arith.constant 0 : i32
    return %arg0, %c0_i32 : i32, i32
  }
  func.func @transform_1(%arg0: i32) -> (i32, i32) {
    %c0_i32 = arith.constant 0 : i32
    %c0_i32_0 = arith.constant 0 : i32
    return %arg0, %c0_i32 : i32, i32
  }
  func.func @transform_2(%arg0: i32) -> (i32, i32) {
    %c0_i32 = arith.constant 0 : i32
    %c0_i32_0 = arith.constant 0 : i32
    %c0_i32_1 = arith.constant 0 : i32
    return %c0_i32, %c0_i32_0 : i32, i32
  }
  func.func @transform_3(%arg0: i32) -> i32 {
    %c0_i32 = arith.constant 0 : i32
    %c0_i32_0 = arith.constant 0 : i32
    return %c0_i32 : i32
  }
  func.func @transform_4(%arg0: i32) -> i32 {
    %c0_i32 = arith.constant 0 : i32
    %c0_i32_0 = arith.constant 0 : i32
    return %c0_i32 : i32
  }
  func.func @transform_5(%arg0: i32) -> i32 {
    %c0_i32 = arith.constant 0 : i32
    %c0_i32_0 = arith.constant 0 : i32
    return %c0_i32 : i32
  }
  func.func @transform_6(%arg0: i32) -> (i32, i32) {
    %c0_i32 = arith.constant 0 : i32
    %c0_i32_0 = arith.constant 0 : i32
    return %arg0, %c0_i32 : i32, i32
  }
}

</mosaic_0001>

<llo_original>
// kernel: tpu_custom_call.1
$region0: #{tpu_custom_call.1}
  #allocation0 [shape = 'u32[]', space=smem, size = 0x4, offset = 0x4, fixed_abs, tag = 'smem constant byte address 0x4 - core index']
  #allocation1 [shape = 'u32[144,128]{1,0:T(1,128)}', space=vmem, size = 0x12000, scoped, tag = 'internal scratch']
  #allocation2 [shape = 'f32[1]{0:T(128)S(6)}', space=smem, size = 0x200, scoped, tag = 'scoped memory for tpu_custom_call.1']
  %s0 = inlined_call_operand.hbm [shape: f32[8,128], index: 0, kind: input, shape index: {}]
  %s1 = inlined_call_operand.hbm [shape: f32[8,128], index: 1, kind: input, shape index: {}]
  %s2 = inlined_call_operand.hbm [shape: f32[10,10], index: 2, kind: input, shape index: {}]
  %s3 = inlined_call_operand.vmem [shape: f32[10], index: 3, kind: input, shape index: {}]
  %s4 = inlined_call_operand.vmem [shape: f32[10], index: 4, kind: input, shape index: {}]
  %s5 = inlined_call_operand.<no memory space> [shape: f32[1], index: 5, kind: input, shape index: {}]
  %s6 = inlined_call_operand.hbm [shape: f32[8,128], index: 6, kind: output, shape index: {}]
  %s7 = sld [smem:[#allocation0]]
  $region54: #{tpu_custom_call.1} parent=0
    _
  %s9 = ssub.s32 1, %s7
  %s10 = scalar_select 0, %s9, %s7
  %11 = sst [smem:[#allocation2]] %s5
  $region1: #{tpu_custom_call.1} parent=0
    #allocation3 [shape = 'u8[4096]{0}', space=vmem, size = 0x1000, scoped, tag = 'input window, operand 0, single buffered']
    #allocation4 [shape = 's32[1]{0}', space=sflag, size = 0x4, scoped, tag = 'scoped memory for tpu_custom_call.1']
    #allocation5 [shape = 's32[1]{0}', space=sflag, size = 0x4, scoped, tag = 'scoped memory for tpu_custom_call.1']
    #allocation6 [shape = 's32[1]{0}', space=sflag, size = 0x4, scoped, tag = 'scoped memory for tpu_custom_call.1']
    #allocation7 [shape = 's32[1]{0}', space=sflag, size = 0x4, scoped, tag = 'scoped memory for tpu_custom_call.1']
    #allocation8 [shape = 'u8[4096]{0}', space=vmem, size = 0x1000, scoped, tag = 'input window, operand 1, single buffered']
    #allocation9 [shape = 's32[1]{0}', space=sflag, size = 0x4, scoped, tag = 'scoped memory for tpu_custom_call.1']
    #allocation10 [shape = 'u8[8192]{0}', space=smem, size = 0x2000, scoped, tag = 'input window, operand 2, single buffered']
    #allocation11 [shape = 'u8[512]{0}', space=smem, size = 0x200, scoped, tag = 'input window, operand 3, single buffered']
    #allocation12 [shape = 'u8[512]{0}', space=smem, size = 0x200, scoped, tag = 'input window, operand 4, single buffered']
    #allocation13 [shape = 's32[1]{0}', space=sflag, size = 0x4, scoped, tag = 'scoped memory for tpu_custom_call.1']
    #allocation14 [shape = 'u8[4096]{0}', space=vmem, size = 0x1000, scoped, tag = 'output window, operand 0, single buffered']
    %12 = vsyncpa [#allocation4], 0
    %13 = vsyncpa [#allocation9], 0
    %14 = vsyncpa [#allocation6], 0
    %15 = vsyncpa [#allocation7], 0
    %16 = vsyncpa [#allocation13], 0
    %17 = vsyncpa [#allocation5], 0
    // Predicated region
    $region2: #{tpu_custom_call.1} parent=1 // pred_check
      _
    $region3: #{tpu_custom_call.1} parent=1 // pred_check_branch
      %19 = sbr.rel (0) target = $region5
    $region4: #{tpu_custom_call.1} parent=1 // pred_region
      %s21 = ssub.s32 128, 128
      %22 = vsyncadd [#allocation4], %s21
      %s24 = sshll.u32 [#allocation3], 4
      %s25 = int_to_ptr.vmem [resolvable:$true] %s24
      %27 = dma.hbm_to_vmem [thread:$0]  %s0, 128, %s25, [#allocation4]
    $region5: #{tpu_custom_call.1} parent=1 // pred_fallthru
      _
    // Predicated region
    $region6: #{tpu_custom_call.1} parent=1 // pred_check
      _
    $region7: #{tpu_custom_call.1} parent=1 // pred_check_branch
      %29 = sbr.rel (0) target = $region9
    $region8: #{tpu_custom_call.1} parent=1 // pred_region
      %s31 = ssub.s32 128, 128
      %32 = vsyncadd [#allocation9], %s31
      %s34 = sshll.u32 [#allocation8], 4
      %s35 = int_to_ptr.vmem [resolvable:$true] %s34
      %37 = dma.hbm_to_vmem [thread:$0]  %s1, 128, %s35, [#allocation9]
    $region9: #{tpu_custom_call.1} parent=1 // pred_fallthru
      _
    // Predicated region
    $region10: #{tpu_custom_call.1} parent=1 // pred_check
      _
    $region11: #{tpu_custom_call.1} parent=1 // pred_check_branch
      %39 = sbr.rel (0) target = $region13
    $region12: #{tpu_custom_call.1} parent=1 // pred_region
      %s41 = ssub.s32 256, 256
      %42 = vsyncadd [#allocation6], %s41
      %47 = dma.hbm_to_smem %s2, 256, [#allocation10], [#allocation6], 128, 128, 8
    $region13: #{tpu_custom_call.1} parent=1 // pred_fallthru
      _
    // Predicated region
    $region14: #{tpu_custom_call.1} parent=1 // pred_check
      _
    $region15: #{tpu_custom_call.1} parent=1 // pred_check_branch
      %49 = sbr.rel (0) target = $region17
    $region16: #{tpu_custom_call.1} parent=1 // pred_region
      %s51 = ssub.s32 16, 16
      %52 = vsyncadd [#allocation7], %s51
      %s54 = sshll.u32 %s3, 4
      %s55 = int_to_ptr.vmem [resolvable:$true] %s54
      %57 = dma.vmem_to_smem %s55, 16, [#allocation11], [#allocation7]
    $region17: #{tpu_custom_call.1} parent=1 // pred_fallthru
      _
    // Predicated region
    $region18: #{tpu_custom_call.1} parent=1 // pred_check
      _
    $region19: #{tpu_custom_call.1} parent=1 // pred_check_branch
      %59 = sbr.rel (0) target = $region21
    $region20: #{tpu_custom_call.1} parent=1 // pred_region
      %s61 = ssub.s32 16, 16
      %62 = vsyncadd [#allocation13], %s61
      %s64 = sshll.u32 %s4, 4
      %s65 = int_to_ptr.vmem [resolvable:$true] %s64
      %67 = dma.vmem_to_smem %s65, 16, [#allocation12], [#allocation13]
    $region21: #{tpu_custom_call.1} parent=1 // pred_fallthru
      _
    // Predicated region
    $region22: #{tpu_custom_call.1} parent=1 // pred_check
      _
    $region23: #{tpu_custom_call.1} parent=1 // pred_check_branch
      %69 = sbr.rel (0) target = $region25
    $region24: #{tpu_custom_call.1} parent=1 // pred_region
      _
    $region25: #{tpu_custom_call.1} parent=1 // pred_fallthru
      _
    // Predicated region
    $region26: #{tpu_custom_call.1} parent=1 // pred_check
      _
    $region27: #{tpu_custom_call.1} parent=1 // pred_check_branch
      %71 = sbr.rel (0) target = $region29
    $region28: #{tpu_custom_call.1} parent=1 // pred_region
      %72 = dma.done [#allocation4], 128
    $region29: #{tpu_custom_call.1} parent=1 // pred_fallthru
      _
    // Predicated region
    $region30: #{tpu_custom_call.1} parent=1 // pred_check
      _
    $region31: #{tpu_custom_call.1} parent=1 // pred_check_branch
      %74 = sbr.rel (0) target = $region33
    $region32: #{tpu_custom_call.1} parent=1 // pred_region
      %75 = dma.done [#allocation9], 128
    $region33: #{tpu_custom_call.1} parent=1 // pred_fallthru
      _
    // Predicated region
    $region34: #{tpu_custom_call.1} parent=1 // pred_check
      _
    $region35: #{tpu_custom_call.1} parent=1 // pred_check_branch
      %77 = sbr.rel (0) target = $region37
    $region36: #{tpu_custom_call.1} parent=1 // pred_region
      %78 = dma.done [#allocation6], 256
    $region37: #{tpu_custom_call.1} parent=1 // pred_fallthru
      _
    // Predicated region
    $region38: #{tpu_custom_call.1} parent=1 // pred_check
      _
    $region39: #{tpu_custom_call.1} parent=1 // pred_check_branch
      %80 = sbr.rel (0) target = $region41
    $region40: #{tpu_custom_call.1} parent=1 // pred_region
      %81 = dma.done [#allocation7], 16
    $region41: #{tpu_custom_call.1} parent=1 // pred_fallthru
      _
    // Predicated region
    $region42: #{tpu_custom_call.1} parent=1 // pred_check
      _
    $region43: #{tpu_custom_call.1} parent=1 // pred_check_branch
      %83 = sbr.rel (0) target = $region45
    $region44: #{tpu_custom_call.1} parent=1 // pred_region
      %84 = dma.done [#allocation13], 16
    $region45: #{tpu_custom_call.1} parent=1 // pred_fallthru
      _
    %85 = sfence
    %v86 = vld [vmem:[#allocation3] sm:$0xff]
    %v87 = vld [vmem:[#allocation8] sm:$0xff]
    %v88 = vmul.f32 %v86, %v87
    %v89 = vmul.f32 %v86, %v86
    %v90 = vmul.f32 %v86, %v88
    %v91 = vmul.f32 %v88, %v88
    %v92 = vmul.f32 %v89, %v86
    %v93 = vmul.f32 %v89, %v88
    %v94 = vmul.f32 %v91, %v86
    %v95 = vmul.f32 %v91, %v88
    %s96 = sld [smem:[#allocation2]]
    %s97 = sld [smem:[#allocation11]]
    %s98 = sld [smem:[#allocation10]]
    %s99 = sadd.f32 %s97, %s98
    %s100 = sld [smem:[#allocation10 + $0x80]]
    %v101 = vstv %s100
    %v102 = vmul.f32 %v101, %v86
    %v103 = vstv %s99
    %v104 = vadd.f32 %v103, %v102
    %s105 = sld [smem:[#allocation10 + $0x100]]
    %v106 = vstv %s105
    %v107 = vmul.f32 %v106, %v88
    %v108 = vadd.f32 %v104, %v107
    %s109 = sld [smem:[#allocation10 + $0x180]]
    %v110 = vstv %s109
    %v111 = vmul.f32 %v110, %v89
    %v112 = vadd.f32 %v108, %v111
    %s113 = sld [smem:[#allocation10 + $0x200]]
    %v114 = vstv %s113
    %v115 = vmul.f32 %v114, %v90
    %v116 = vadd.f32 %v112, %v115
    %s117 = sld [smem:[#allocation10 + $0x280]]
    %v118 = vstv %s117
    %v119 = vmul.f32 %v118, %v91
    %v120 = vadd.f32 %v116, %v119
    %s121 = sld [smem:[#allocation10 + $0x300]]
    %v122 = vstv %s121
    %v123 = vmul.f32 %v122, %v92
    %v124 = vadd.f32 %v120, %v123
    %s125 = sld [smem:[#allocation10 + $0x380]]
    %v126 = vstv %s125
    %v127 = vmul.f32 %v126, %v93
    %v128 = vadd.f32 %v124, %v127
    %s129 = sld [smem:[#allocation10 + $0x400]]
    %v130 = vstv %s129
    %v131 = vmul.f32 %v130, %v94
    %v132 = vadd.f32 %v128, %v131
    %s133 = sld [smem:[#allocation10 + $0x480]]
    %v134 = vstv %s133
    %v135 = vmul.f32 %v134, %v95
    %v136 = vadd.f32 %v132, %v135
    %v137 = vmax.f32 %v136, 0.0
    %s138 = sld [smem:[#allocation12]]
    %v139 = vstv %s138
    %v140 = vmul.f32 %v139, %v137
    %v141 = vstv %s96
    %v142 = vadd.f32 %v141, %v140
    %s143 = sld [smem:[#allocation11 + $0x1]]
    %s144 = sld [smem:[#allocation10 + $0x1]]
    %s145 = sadd.f32 %s143, %s144
    %s146 = sld [smem:[#allocation10 + $0x81]]
    %v147 = vstv %s146
    %v148 = vmul.f32 %v147, %v86
    %v149 = vstv %s145
    %v150 = vadd.f32 %v149, %v148
    %s151 = sld [smem:[#allocation10 + $0x101]]
    %v152 = vstv %s151
    %v153 = vmul.f32 %v152, %v88
    %v154 = vadd.f32 %v150, %v153
    %s155 = sld [smem:[#allocation10 + $0x181]]
    %v156 = vstv %s155
    %v157 = vmul.f32 %v156, %v89
    %v158 = vadd.f32 %v154, %v157
    %s159 = sld [smem:[#allocation10 + $0x201]]
    %v160 = vstv %s159
    %v161 = vmul.f32 %v160, %v90
    %v162 = vadd.f32 %v158, %v161
    %s163 = sld [smem:[#allocation10 + $0x281]]
    %v164 = vstv %s163
    %v165 = vmul.f32 %v164, %v91
    %v166 = vadd.f32 %v162, %v165
    %s167 = sld [smem:[#allocation10 + $0x301]]
    %v168 = vstv %s167
    %v169 = vmul.f32 %v168, %v92
    %v170 = vadd.f32 %v166, %v169
    %s171 = sld [smem:[#allocation10 + $0x381]]
    %v172 = vstv %s171
    %v173 = vmul.f32 %v172, %v93
    %v174 = vadd.f32 %v170, %v173
    %s175 = sld [smem:[#allocation10 + $0x401]]
    %v176 = vstv %s175
    %v177 = vmul.f32 %v176, %v94
    %v178 = vadd.f32 %v174, %v177
    %s179 = sld [smem:[#allocation10 + $0x481]]
    %v180 = vstv %s179
    %v181 = vmul.f32 %v180, %v95
    %v182 = vadd.f32 %v178, %v181
    %v183 = vmax.f32 %v182, 0.0
    %s184 = sld [smem:[#allocation12 + $0x1]]
    %v185 = vstv %s184
    %v186 = vmul.f32 %v185, %v183
    %v187 = vadd.f32 %v142, %v186
    %s188 = sld [smem:[#allocation11 + $0x2]]
    %s189 = sld [smem:[#allocation10 + $0x2]]
    %s190 = sadd.f32 %s188, %s189
    %s191 = sld [smem:[#allocation10 + $0x82]]
    %v192 = vstv %s191
    %v193 = vmul.f32 %v192, %v86
    %v194 = vstv %s190
    %v195 = vadd.f32 %v194, %v193
    %s196 = sld [smem:[#allocation10 + $0x102]]
    %v197 = vstv %s196
    %v198 = vmul.f32 %v197, %v88
    %v199 = vadd.f32 %v195, %v198
    %s200 = sld [smem:[#allocation10 + $0x182]]
    %v201 = vstv %s200
    %v202 = vmul.f32 %v201, %v89
    %v203 = vadd.f32 %v199, %v202
    %s204 = sld [smem:[#allocation10 + $0x202]]
    %v205 = vstv %s204
    %v206 = vmul.f32 %v205, %v90
    %v207 = vadd.f32 %v203, %v206
    %s208 = sld [smem:[#allocation10 + $0x282]]
    %v209 = vstv %s208
    %v210 = vmul.f32 %v209, %v91
    %v211 = vadd.f32 %v207, %v210
    %s212 = sld [smem:[#allocation10 + $0x302]]
    %v213 = vstv %s212
    %v214 = vmul.f32 %v213, %v92
    %v215 = vadd.f32 %v211, %v214
    %s216 = sld [smem:[#allocation10 + $0x382]]
    %v217 = vstv %s216
    %v218 = vmul.f32 %v217, %v93
    %v219 = vadd.f32 %v215, %v218
    %s220 = sld [smem:[#allocation10 + $0x402]]
    %v221 = vstv %s220
    %v222 = vmul.f32 %v221, %v94
    %v223 = vadd.f32 %v219, %v222
    %s224 = sld [smem:[#allocation10 + $0x482]]
    %v225 = vstv %s224
    %v226 = vmul.f32 %v225, %v95
    %v227 = vadd.f32 %v223, %v226
    %v228 = vmax.f32 %v227, 0.0
    %s229 = sld [smem:[#allocation12 + $0x2]]
    %v230 = vstv %s229
    %v231 = vmul.f32 %v230, %v228
    %v232 = vadd.f32 %v187, %v231
    %s233 = sld [smem:[#allocation11 + $0x3]]
    %s234 = sld [smem:[#allocation10 + $0x3]]
    %s235 = sadd.f32 %s233, %s234
    %s236 = sld [smem:[#allocation10 + $0x83]]
    %v237 = vstv %s236
    %v238 = vmul.f32 %v237, %v86
    %v239 = vstv %s235
    %v240 = vadd.f32 %v239, %v238
    %s241 = sld [smem:[#allocation10 + $0x103]]
    %v242 = vstv %s241
    %v243 = vmul.f32 %v242, %v88
    %v244 = vadd.f32 %v240, %v243
    %s245 = sld [smem:[#allocation10 + $0x183]]
    %v246 = vstv %s245
    %v247 = vmul.f32 %v246, %v89
    %v248 = vadd.f32 %v244, %v247
    %s249 = sld [smem:[#allocation10 + $0x203]]
    %v250 = vstv %s249
    %v251 = vmul.f32 %v250, %v90
    %v252 = vadd.f32 %v248, %v251
    %s253 = sld [smem:[#allocation10 + $0x283]]
    %v254 = vstv %s253
    %v255 = vmul.f32 %v254, %v91
    %v256 = vadd.f32 %v252, %v255
    %s257 = sld [smem:[#allocation10 + $0x303]]
    %v258 = vstv %s257
    %v259 = vmul.f32 %v258, %v92
    %v260 = vadd.f32 %v256, %v259
    %s261 = sld [smem:[#allocation10 + $0x383]]
    %v262 = vstv %s261
    %v263 = vmul.f32 %v262, %v93
    %v264 = vadd.f32 %v260, %v263
    %s265 = sld [smem:[#allocation10 + $0x403]]
    %v266 = vstv %s265
    %v267 = vmul.f32 %v266, %v94
    %v268 = vadd.f32 %v264, %v267
    %s269 = sld [smem:[#allocation10 + $0x483]]
    %v270 = vstv %s269
    %v271 = vmul.f32 %v270, %v95
    %v272 = vadd.f32 %v268, %v271
    %v273 = vmax.f32 %v272, 0.0
    %s274 = sld [smem:[#allocation12 + $0x3]]
    %v275 = vstv %s274
    %v276 = vmul.f32 %v275, %v273
    %v277 = vadd.f32 %v232, %v276
    %s278 = sld [smem:[#allocation11 + $0x4]]
    %s279 = sld [smem:[#allocation10 + $0x4]]
    %s280 = sadd.f32 %s278, %s279
    %s281 = sld [smem:[#allocation10 + $0x84]]
    %v282 = vstv %s281
    %v283 = vmul.f32 %v282, %v86
    %v284 = vstv %s280
    %v285 = vadd.f32 %v284, %v283
    %s286 = sld [smem:[#allocation10 + $0x104]]
    %v287 = vstv %s286
    %v288 = vmul.f32 %v287, %v88
    %v289 = vadd.f32 %v285, %v288
    %s290 = sld [smem:[#allocation10 + $0x184]]
    %v291 = vstv %s290
    %v292 = vmul.f32 %v291, %v89
    %v293 = vadd.f32 %v289, %v292
    %s294 = sld [smem:[#allocation10 + $0x204]]
    %v295 = vstv %s294
    %v296 = vmul.f32 %v295, %v90
    %v297 = vadd.f32 %v293, %v296
    %s298 = sld [smem:[#allocation10 + $0x284]]
    %v299 = vstv %s298
    %v300 = vmul.f32 %v299, %v91
    %v301 = vadd.f32 %v297, %v300
    %s302 = sld [smem:[#allocation10 + $0x304]]
    %v303 = vstv %s302
    %v304 = vmul.f32 %v303, %v92
    %v305 = vadd.f32 %v301, %v304
    %s306 = sld [smem:[#allocation10 + $0x384]]
    %v307 = vstv %s306
    %v308 = vmul.f32 %v307, %v93
    %v309 = vadd.f32 %v305, %v308
    %s310 = sld [smem:[#allocation10 + $0x404]]
    %v311 = vstv %s310
    %v312 = vmul.f32 %v311, %v94
    %v313 = vadd.f32 %v309, %v312
    %s314 = sld [smem:[#allocation10 + $0x484]]
    %v315 = vstv %s314
    %v316 = vmul.f32 %v315, %v95
    %v317 = vadd.f32 %v313, %v316
    %v318 = vmax.f32 %v317, 0.0
    %s319 = sld [smem:[#allocation12 + $0x4]]
    %v320 = vstv %s319
    %v321 = vmul.f32 %v320, %v318
    %v322 = vadd.f32 %v277, %v321
    %s323 = sld [smem:[#allocation11 + $0x5]]
    %s324 = sld [smem:[#allocation10 + $0x5]]
    %s325 = sadd.f32 %s323, %s324
    %s326 = sld [smem:[#allocation10 + $0x85]]
    %v327 = vstv %s326
    %v328 = vmul.f32 %v327, %v86
    %v329 = vstv %s325
    %v330 = vadd.f32 %v329, %v328
    %s331 = sld [smem:[#allocation10 + $0x105]]
    %v332 = vstv %s331
    %v333 = vmul.f32 %v332, %v88
    %v334 = vadd.f32 %v330, %v333
    %s335 = sld [smem:[#allocation10 + $0x185]]
    %v336 = vstv %s335
    %v337 = vmul.f32 %v336, %v89
    %v338 = vadd.f32 %v334, %v337
    %s339 = sld [smem:[#allocation10 + $0x205]]
    %v340 = vstv %s339
    %v341 = vmul.f32 %v340, %v90
    %v342 = vadd.f32 %v338, %v341
    %s343 = sld [smem:[#allocation10 + $0x285]]
    %v344 = vstv %s343
    %v345 = vmul.f32 %v344, %v91
    %v346 = vadd.f32 %v342, %v345
    %s347 = sld [smem:[#allocation10 + $0x305]]
    %v348 = vstv %s347
    %v349 = vmul.f32 %v348, %v92
    %v350 = vadd.f32 %v346, %v349
    %s351 = sld [smem:[#allocation10 + $0x385]]
    %v352 = vstv %s351
    %v353 = vmul.f32 %v352, %v93
    %v354 = vadd.f32 %v350, %v353
    %s355 = sld [smem:[#allocation10 + $0x405]]
    %v356 = vstv %s355
    %v357 = vmul.f32 %v356, %v94
    %v358 = vadd.f32 %v354, %v357
    %s359 = sld [smem:[#allocation10 + $0x485]]
    %v360 = vstv %s359
    %v361 = vmul.f32 %v360, %v95
    %v362 = vadd.f32 %v358, %v361
    %v363 = vmax.f32 %v362, 0.0
    %s364 = sld [smem:[#allocation12 + $0x5]]
    %v365 = vstv %s364
    %v366 = vmul.f32 %v365, %v363
    %v367 = vadd.f32 %v322, %v366
    %s368 = sld [smem:[#allocation11 + $0x6]]
    %s369 = sld [smem:[#allocation10 + $0x6]]
    %s370 = sadd.f32 %s368, %s369
    %s371 = sld [smem:[#allocation10 + $0x86]]
    %v372 = vstv %s371
    %v373 = vmul.f32 %v372, %v86
    %v374 = vstv %s370
    %v375 = vadd.f32 %v374, %v373
    %s376 = sld [smem:[#allocation10 + $0x106]]
    %v377 = vstv %s376
    %v378 = vmul.f32 %v377, %v88
    %v379 = vadd.f32 %v375, %v378
    %s380 = sld [smem:[#allocation10 + $0x186]]
    %v381 = vstv %s380
    %v382 = vmul.f32 %v381, %v89
    %v383 = vadd.f32 %v379, %v382
    %s384 = sld [smem:[#allocation10 + $0x206]]
    %v385 = vstv %s384
    %v386 = vmul.f32 %v385, %v90
    %v387 = vadd.f32 %v383, %v386
    %s388 = sld [smem:[#allocation10 + $0x286]]
    %v389 = vstv %s388
    %v390 = vmul.f32 %v389, %v91
    %v391 = vadd.f32 %v387, %v390
    %s392 = sld [smem:[#allocation10 + $0x306]]
    %v393 = vstv %s392
    %v394 = vmul.f32 %v393, %v92
    %v395 = vadd.f32 %v391, %v394
    %s396 = sld [smem:[#allocation10 + $0x386]]
    %v397 = vstv %s396
    %v398 = vmul.f32 %v397, %v93
    %v399 = vadd.f32 %v395, %v398
    %s400 = sld [smem:[#allocation10 + $0x406]]
    %v401 = vstv %s400
    %v402 = vmul.f32 %v401, %v94
    %v403 = vadd.f32 %v399, %v402
    %s404 = sld [smem:[#allocation10 + $0x486]]
    %v405 = vstv %s404
    %v406 = vmul.f32 %v405, %v95
    %v407 = vadd.f32 %v403, %v406
    %v408 = vmax.f32 %v407, 0.0
    %s409 = sld [smem:[#allocation12 + $0x6]]
    %v410 = vstv %s409
    %v411 = vmul.f32 %v410, %v408
    %v412 = vadd.f32 %v367, %v411
    %s413 = sld [smem:[#allocation11 + $0x7]]
    %s414 = sld [smem:[#allocation10 + $0x7]]
    %s415 = sadd.f32 %s413, %s414
    %s416 = sld [smem:[#allocation10 + $0x87]]
    %v417 = vstv %s416
    %v418 = vmul.f32 %v417, %v86
    %v419 = vstv %s415
    %v420 = vadd.f32 %v419, %v418
    %s421 = sld [smem:[#allocation10 + $0x107]]
    %v422 = vstv %s421
    %v423 = vmul.f32 %v422, %v88
    %v424 = vadd.f32 %v420, %v423
    %s425 = sld [smem:[#allocation10 + $0x187]]
    %v426 = vstv %s425
    %v427 = vmul.f32 %v426, %v89
    %v428 = vadd.f32 %v424, %v427
    %s429 = sld [smem:[#allocation10 + $0x207]]
    %v430 = vstv %s429
    %v431 = vmul.f32 %v430, %v90
    %v432 = vadd.f32 %v428, %v431
    %s433 = sld [smem:[#allocation10 + $0x287]]
    %v434 = vstv %s433
    %v435 = vmul.f32 %v434, %v91
    %v436 = vadd.f32 %v432, %v435
    %s437 = sld [smem:[#allocation10 + $0x307]]
    %v438 = vstv %s437
    %v439 = vmul.f32 %v438, %v92
    %v440 = vadd.f32 %v436, %v439
    %s441 = sld [smem:[#allocation10 + $0x387]]
    %v442 = vstv %s441
    %v443 = vmul.f32 %v442, %v93
    %v444 = vadd.f32 %v440, %v443
    %s445 = sld [smem:[#allocation10 + $0x407]]
    %v446 = vstv %s445
    %v447 = vmul.f32 %v446, %v94
    %v448 = vadd.f32 %v444, %v447
    %s449 = sld [smem:[#allocation10 + $0x487]]
    %v450 = vstv %s449
    %v451 = vmul.f32 %v450, %v95
    %v452 = vadd.f32 %v448, %v451
    %v453 = vmax.f32 %v452, 0.0
    %s454 = sld [smem:[#allocation12 + $0x7]]
    %v455 = vstv %s454
    %v456 = vmul.f32 %v455, %v453
    %v457 = vadd.f32 %v412, %v456
    %s458 = sld [smem:[#allocation11 + $0x8]]
    %s459 = sld [smem:[#allocation10 + $0x8]]
    %s460 = sadd.f32 %s458, %s459
    %s461 = sld [smem:[#allocation10 + $0x88]]
    %v462 = vstv %s461
    %v463 = vmul.f32 %v462, %v86
    %v464 = vstv %s460
    %v465 = vadd.f32 %v464, %v463
    %s466 = sld [smem:[#allocation10 + $0x108]]
    %v467 = vstv %s466
    %v468 = vmul.f32 %v467, %v88
    %v469 = vadd.f32 %v465, %v468
    %s470 = sld [smem:[#allocation10 + $0x188]]
    %v471 = vstv %s470
    %v472 = vmul.f32 %v471, %v89
    %v473 = vadd.f32 %v469, %v472
    %s474 = sld [smem:[#allocation10 + $0x208]]
    %v475 = vstv %s474
    %v476 = vmul.f32 %v475, %v90
    %v477 = vadd.f32 %v473, %v476
    %s478 = sld [smem:[#allocation10 + $0x288]]
    %v479 = vstv %s478
    %v480 = vmul.f32 %v479, %v91
    %v481 = vadd.f32 %v477, %v480
    %s482 = sld [smem:[#allocation10 + $0x308]]
    %v483 = vstv %s482
    %v484 = vmul.f32 %v483, %v92
    %v485 = vadd.f32 %v481, %v484
    %s486 = sld [smem:[#allocation10 + $0x388]]
    %v487 = vstv %s486
    %v488 = vmul.f32 %v487, %v93
    %v489 = vadd.f32 %v485, %v488
    %s490 = sld [smem:[#allocation10 + $0x408]]
    %v491 = vstv %s490
    %v492 = vmul.f32 %v491, %v94
    %v493 = vadd.f32 %v489, %v492
    %s494 = sld [smem:[#allocation10 + $0x488]]
    %v495 = vstv %s494
    %v496 = vmul.f32 %v495, %v95
    %v497 = vadd.f32 %v493, %v496
    %v498 = vmax.f32 %v497, 0.0
    %s499 = sld [smem:[#allocation12 + $0x8]]
    %v500 = vstv %s499
    %v501 = vmul.f32 %v500, %v498
    %v502 = vadd.f32 %v457, %v501
    %s503 = sld [smem:[#allocation11 + $0x9]]
    %s504 = sld [smem:[#allocation10 + $0x9]]
    %s505 = sadd.f32 %s503, %s504
    %s506 = sld [smem:[#allocation10 + $0x89]]
    %v507 = vstv %s506
    %v508 = vmul.f32 %v507, %v86
    %v509 = vstv %s505
    %v510 = vadd.f32 %v509, %v508
    %s511 = sld [smem:[#allocation10 + $0x109]]
    %v512 = vstv %s511
    %v513 = vmul.f32 %v512, %v88
    %v514 = vadd.f32 %v510, %v513
    %s515 = sld [smem:[#allocation10 + $0x189]]
    %v516 = vstv %s515
    %v517 = vmul.f32 %v516, %v89
    %v518 = vadd.f32 %v514, %v517
    %s519 = sld [smem:[#allocation10 + $0x209]]
    %v520 = vstv %s519
    %v521 = vmul.f32 %v520, %v90
    %v522 = vadd.f32 %v518, %v521
    %s523 = sld [smem:[#allocation10 + $0x289]]
    %v524 = vstv %s523
    %v525 = vmul.f32 %v524, %v91
    %v526 = vadd.f32 %v522, %v525
    %s527 = sld [smem:[#allocation10 + $0x309]]
    %v528 = vstv %s527
    %v529 = vmul.f32 %v528, %v92
    %v530 = vadd.f32 %v526, %v529
    %s531 = sld [smem:[#allocation10 + $0x389]]
    %v532 = vstv %s531
    %v533 = vmul.f32 %v532, %v93
    %v534 = vadd.f32 %v530, %v533
    %s535 = sld [smem:[#allocation10 + $0x409]]
    %v536 = vstv %s535
    %v537 = vmul.f32 %v536, %v94
    %v538 = vadd.f32 %v534, %v537
    %s539 = sld [smem:[#allocation10 + $0x489]]
    %v540 = vstv %s539
    %v541 = vmul.f32 %v540, %v95
    %v542 = vadd.f32 %v538, %v541
    %v543 = vmax.f32 %v542, 0.0
    %s544 = sld [smem:[#allocation12 + $0x9]]
    %v545 = vstv %s544
    %v546 = vmul.f32 %v545, %v543
    %v547 = vadd.f32 %v502, %v546
    %v548 = vsub.f32 0.0, %v547
    %v549 = vmul.f32 %v548, 1.442695
    %v550 = vpow.pop %v549
    %v551 = vadd.f32 %v550, 1.0
    %v552 = vrcp.pop %v551
    %v553 = vmul.f32 %v552, 5.0
    %554 = vst [vmem:[#allocation14] sm:$0xff] %v553
    // Predicated region
    $region46: #{tpu_custom_call.1} parent=1 // pred_check
      _
    $region47: #{tpu_custom_call.1} parent=1 // pred_check_branch
      %556 = sbr.rel (0) target = $region49
    $region48: #{tpu_custom_call.1} parent=1 // pred_region
      %s558 = ssub.s32 128, 128
      %559 = vsyncadd [#allocation5], %s558
      %s561 = sshll.u32 [#allocation14], 4
      %s562 = int_to_ptr.vmem [resolvable:$true] %s561
      %564 = dma.vmem_to_hbm [thread:$0]  %s562, 128, %s6, [#allocation5]
    $region49: #{tpu_custom_call.1} parent=1 // pred_fallthru
      _
    // Predicated region
    $region50: #{tpu_custom_call.1} parent=1 // pred_check
      _
    $region51: #{tpu_custom_call.1} parent=1 // pred_check_branch
      %566 = sbr.rel (0) target = $region53
    $region52: #{tpu_custom_call.1} parent=1 // pred_region
      %567 = dma.done [#allocation5], 128
    $region53: #{tpu_custom_call.1} parent=1 // pred_fallthru
      _
    %568 = vsyncpa [#allocation4], 1
    %569 = vsyncpa [#allocation9], 1
    %570 = vsyncpa [#allocation5], 1
    %571 = vsyncpa [#allocation6], 1
    %572 = vsyncpa [#allocation7], 1
    %573 = vsyncpa [#allocation13], 1

</llo_original>
